<compile_context>
chip_gen: v5e
topology: v5e:2x2
jax: 0.10.0
libtpu: 0.0.40
codegen_flags: <defaults>
</compile_context>

<pallas_src>
import jax
import jax.numpy as jnp
from jax.experimental import pallas as pl
from jax.experimental.pallas import tpu as pltpu

INPUT_FEATURES = 28
KERNEL_SIZE = 11


def _local_extractor_kernel(x_ref, w_ref, scale_ref, bias_ref, mask_ref, o_ref):
    """One grid step = TB batch elements, lane-packed.

    x_ref    : (1, K*C_in, N)   im2col slab, N = TB * L (lane-dense)
    w_ref    : (C_out, K*C_in)  conv weight with taps folded into the contraction dim
    scale_ref: (C_out, 1)       folded BN scale  gamma / sqrt(var + eps)
    bias_ref : (C_out, 1)       folded conv-bias + BN shift
    mask_ref : (1, 1, N)        binary mask, lane-packed like the output
    o_ref    : (1, C_out, N)    output
    """
    # Single MXU matmul: contraction depth K*C_in = 308 (vs 11 sliver matmuls of depth 28),
    # one vmatmul stream and no per-tap VALU accumulate adds.
    y = jnp.dot(w_ref[...], x_ref[0], preferred_element_type=jnp.float32)
    y = y * scale_ref[...] + bias_ref[...]            # conv bias + BatchNorm (eval) fused
    y = jnp.where(y >= 0, y, jnp.float32(0.01) * y)   # LeakyReLU, default slope 0.01
    # TODO(synk): Dropout(p=0.2) is identity in eval mode; training-mode RNG dropout not applied.
    y = y * mask_ref[0]                               # (1, N) broadcasts over C_out
    o_ref[0] = y.astype(o_ref.dtype)


def _pick_tb(L, min_lanes=128, max_lanes=1024):
    """Batch elements packed per grid step: make TB*L >= 128 lanes, capped at ~1024 lanes."""
    tb = -(-min_lanes // L)                 # smallest TB with TB*L >= 128
    tb = min(tb, max(1, max_lanes // L))    # keep the per-step slab modest
    return max(tb, 1)


def local_extractor_block(x, binary_mask, conv_w, conv_b,
                          bn_gamma, bn_beta, bn_mean, bn_var,
                          *, kernel_size=KERNEL_SIZE, eps=1e-5,
                          compute_dtype=jnp.float32):
    """Pallas implementation of LocalExtractorBlock.forward (eval mode).

    x           : (B, C_in, L) float32
    binary_mask : (B, L)       {0,1}
    conv_w      : (C_out, C_in, K)
    conv_b, bn_*: (C_out,)
    compute_dtype: matmul operand dtype. jnp.bfloat16 is recommended on v6e/v7x for MXU rate
                   if a relaxed (~1e-2) tolerance vs the f32 reference is acceptable; the
                   default f32 keeps the 1e-4 check exact. Epilogue is always f32.
    returns     : (B, C_out, L) float32
    """
    orig_dtype = x.dtype
    B, C_in, L = x.shape
    C_out, _, K = conv_w.shape
    assert K == kernel_size
    pad = (kernel_size - 1) // 2            # "same" padding (stride=1, dilation=1)
    KC = K * C_in

    TB = _pick_tb(L)
    G = pl.cdiv(B, TB)
    Bp = G * TB
    N = TB * L

    if Bp != B:  # pad batch so TB divides it; padded rows are masked to zero and dropped
        x = jnp.pad(x, ((0, Bp - B), (0, 0), (0, 0)))
        binary_mask = jnp.pad(binary_mask, ((0, Bp - B), (0, 0)))

    # im2col in the wrapper (layout plumbing, not compute hoisting):
    #   x2[g, k*C_in + c, t*L + l] = x_pad[g*TB + t, c, l + k]
    x_pad = jnp.pad(x, ((0, 0), (0, 0), (pad, pad)))
    cols = jnp.stack([x_pad[:, :, k:k + L] for k in range(K)], axis=1)   # (Bp, K, C_in, L)
    x2 = (cols.reshape(Bp, KC, L)
              .reshape(G, TB, KC, L)
              .transpose(0, 2, 1, 3)
              .reshape(G, KC, N)
              .astype(compute_dtype))

    # w2[o, k*C_in + c] = conv_w[o, c, k]  (no in-kernel width-1 lane slicing of the weight)
    w2 = conv_w.transpose(0, 2, 1).reshape(C_out, KC).astype(compute_dtype)

    inv_std = 1.0 / jnp.sqrt(bn_var + eps)
    scale = (bn_gamma * inv_std).reshape(C_out, 1).astype(jnp.float32)
    bias = ((conv_b - bn_mean) * bn_gamma * inv_std + bn_beta).reshape(C_out, 1).astype(jnp.float32)
    mask = binary_mask.astype(jnp.float32).reshape(G, 1, N)              # lane-packed like output

    out = pl.pallas_call(
        _local_extractor_kernel,
        out_shape=jax.ShapeDtypeStruct((G, C_out, N), jnp.float32),
        grid_spec=pltpu.PrefetchScalarGridSpec(
            num_scalar_prefetch=0,
            grid=(G,),
            in_specs=[
                pl.BlockSpec((1, KC, N), lambda g: (g, 0, 0)),
                pl.BlockSpec((C_out, KC), lambda g: (0, 0)),   # block-invariant -> DMA hoisted
                pl.BlockSpec((C_out, 1), lambda g: (0, 0)),
                pl.BlockSpec((C_out, 1), lambda g: (0, 0)),
                pl.BlockSpec((1, 1, N), lambda g: (g, 0, 0)),
            ],
            out_specs=pl.BlockSpec((1, C_out, N), lambda g: (g, 0, 0)),
        ),
        # Batch groups are independent: "parallel" lets v7x shard the grid over both TCs
        # (measured-neutral on single-TC v5e/v6e).
        compiler_params=pltpu.CompilerParams(dimension_semantics=("parallel",)),
    )(x2, w2, scale, bias, mask)

    out = (out.reshape(G, C_out, TB, L)
              .transpose(0, 2, 1, 3)
              .reshape(Bp, C_out, L))[:B]
    return out.astype(orig_dtype)


def _reference(x, binary_mask, conv_w, conv_b, bn_gamma, bn_beta, bn_mean, bn_var, eps=1e-5):
    """Pure-JAX reference mirroring PyTorch eval-mode forward."""
    K = conv_w.shape[-1]
    pad = (K - 1) // 2
    o = jax.lax.conv_general_dilated(
        x, conv_w, window_strides=(1,), padding=[(pad, pad)],
        dimension_numbers=("NCH", "OIH", "NCH"))
    o = o + conv_b[None, :, None]
    o = (o - bn_mean[None, :, None]) * (bn_gamma / jnp.sqrt(bn_var + eps))[None, :, None] \
        + bn_beta[None, :, None]
    o = jnp.where(o >= 0, o, 0.01 * o)
    return o * binary_mask[:, None, :].astype(o.dtype)


if __name__ == "__main__":
    B, C_in, C_out, L, K = 2, INPUT_FEATURES, INPUT_FEATURES, 32, KERNEL_SIZE

    key = jax.random.PRNGKey(0)
    kx, km, kw, kb, kg, kbe, krm, krv = jax.random.split(key, 8)

    x = jax.random.normal(kx, (B, C_in, L), dtype=jnp.float32)
    binary_mask = (jax.random.uniform(km, (B, L)) > 0.3).astype(jnp.float32)

    # Deterministic synthetic parameters (shapes from nn.Conv1d / nn.BatchNorm1d __init__).
    fan_in = C_in * K
    bound = 1.0 / (fan_in ** 0.5)
    conv_w = jax.random.uniform(kw, (C_out, C_in, K), minval=-bound, maxval=bound,
                                dtype=jnp.float32)
    conv_b = jax.random.uniform(kb, (C_out,), minval=-bound, maxval=bound, dtype=jnp.float32)
    bn_gamma = 1.0 + 0.1 * jax.random.normal(kg, (C_out,), dtype=jnp.float32)
    bn_beta = 0.1 * jax.random.normal(kbe, (C_out,), dtype=jnp.float32)
    bn_mean = 0.1 * jax.random.normal(krm, (C_out,), dtype=jnp.float32)
    bn_var = jnp.abs(1.0 + 0.1 * jax.random.normal(krv, (C_out,), dtype=jnp.float32))

    out = local_extractor_block(x, binary_mask, conv_w, conv_b,
                                bn_gamma, bn_beta, bn_mean, bn_var)
    out = jax.block_until_ready(out)

    ref = _reference(x, binary_mask, conv_w, conv_b, bn_gamma, bn_beta, bn_mean, bn_var)
    assert out.shape == (B, C_out, L)
    assert jnp.allclose(out, ref, rtol=1e-4, atol=1e-4), "Pallas output mismatch vs reference"

    print("KERNEL_OK")
</pallas_src>

<mosaic_0001>
module attributes {stable_mosaic.version = 11 : i64} {
  func.func @_local_extractor_kernel(%arg0: i32, %arg1: memref<1x308x128xf32, #tpu.memory_space<vmem>>, %arg2: memref<28x308xf32, #tpu.memory_space<vmem>>, %arg3: memref<28x1xf32, #tpu.memory_space<vmem>>, %arg4: memref<28x1xf32, #tpu.memory_space<vmem>>, %arg5: memref<1x1x128xf32, #tpu.memory_space<vmem>>, %arg6: memref<1x28x128xf32, #tpu.memory_space<vmem>>) attributes {dimension_semantics = [#tpu.dimension_semantics<parallel>], iteration_bounds = array<i64: 1>, scalar_prefetch = 0 : i64, scratch_operands = 0 : i64, tpu.core_type = #tpu.core_type<tc>, window_params = [{transform_indices = @transform_0, window_bounds = array<i64: 1, 308, 128>}, {pipeline_mode = #tpu.pipeline_mode<synchronous>, transform_indices = @transform_1, window_bounds = array<i64: 28, 308>}, {pipeline_mode = #tpu.pipeline_mode<synchronous>, transform_indices = @transform_2, window_bounds = array<i64: 28, 1>}, {pipeline_mode = #tpu.pipeline_mode<synchronous>, transform_indices = @transform_3, window_bounds = array<i64: 28, 1>}, {transform_indices = @transform_4, window_bounds = array<i64: 1, 1, 128>}, {transform_indices = @transform_5, window_bounds = array<i64: 1, 28, 128>}]} {
    %c0 = arith.constant 0 : index
    %c0_0 = arith.constant 0 : index
    %0 = vector.load %arg2[%c0, %c0_0] : memref<28x308xf32, #tpu.memory_space<vmem>>, vector<28x308xf32>
    %c0_1 = arith.constant 0 : index
    %c0_2 = arith.constant 0 : index
    %c0_3 = arith.constant 0 : index
    %1 = vector.load %arg1[%c0_1, %c0_2, %c0_3] : memref<1x308x128xf32, #tpu.memory_space<vmem>>, vector<1x308x128xf32>
    %2 = vector.shape_cast %1 : vector<1x308x128xf32> to vector<308x128xf32>
    %cst = arith.constant dense<0.000000e+00> : vector<28x128xf32>
    %3 = tpu.matmul %0, %2, %cst {dimension_numbers = #tpu.dot_dimension_numbers<[1], [0], [0], [1], [0, 0, 1, 1], [], []>} : vector<28x308xf32>, vector<308x128xf32>, vector<28x128xf32> -> vector<28x128xf32>
    %c0_4 = arith.constant 0 : index
    %c0_5 = arith.constant 0 : index
    %4 = vector.load %arg3[%c0_4, %c0_5] : memref<28x1xf32, #tpu.memory_space<vmem>>, vector<28x1xf32>
    %5 = vector.broadcast %4 : vector<28x1xf32> to vector<28x128xf32>
    %6 = arith.mulf %3, %5 : vector<28x128xf32>
    %c0_6 = arith.constant 0 : index
    %c0_7 = arith.constant 0 : index
    %7 = vector.load %arg4[%c0_6, %c0_7] : memref<28x1xf32, #tpu.memory_space<vmem>>, vector<28x1xf32>
    %8 = vector.broadcast %7 : vector<28x1xf32> to vector<28x128xf32>
    %9 = arith.addf %6, %8 : vector<28x128xf32>
    %cst_8 = arith.constant 0.000000e+00 : f32
    %10 = vector.broadcast %cst_8 : f32 to vector<28x128xf32>
    %11 = arith.cmpf oge, %9, %10 : vector<28x128xf32>
    %cst_9 = arith.constant 0.00999999977 : f32
    %12 = vector.broadcast %cst_9 : f32 to vector<28x128xf32>
    %13 = arith.mulf %12, %9 : vector<28x128xf32>
    %14 = arith.select %11, %9, %13 : vector<28x128xi1>, vector<28x128xf32>
    %c0_10 = arith.constant 0 : index
    %c0_11 = arith.constant 0 : index
    %c0_12 = arith.constant 0 : index
    %15 = vector.load %arg5[%c0_10, %c0_11, %c0_12] : memref<1x1x128xf32, #tpu.memory_space<vmem>>, vector<1x1x128xf32>
    %16 = vector.shape_cast %15 : vector<1x1x128xf32> to vector<1x128xf32>
    %17 = vector.broadcast %16 : vector<1x128xf32> to vector<28x128xf32>
    %18 = arith.mulf %14, %17 : vector<28x128xf32>
    %c0_13 = arith.constant 0 : index
    %c0_14 = arith.constant 0 : index
    %c0_15 = arith.constant 0 : index
    %19 = vector.load %arg6[%c0_13, %c0_14, %c0_15] : memref<1x28x128xf32, #tpu.memory_space<vmem>>, vector<1x28x128xf32>
    %20 = vector.shape_cast %19 : vector<1x28x128xf32> to vector<28x128xf32>
    %21 = vector.shape_cast %18 : vector<28x128xf32> to vector<1x28x128xf32>
    tpu.vector_store %arg6[%c0_13, %c0_14, %c0_15], %21 {strides = array<i32>} : memref<1x28x128xf32, #tpu.memory_space<vmem>>, vector<1x28x128xf32>,
    return
  }
  func.func @transform_0(%arg0: i32) -> (i32, i32, i32) {
    %c0_i32 = arith.constant 0 : i32
    %c0_i32_0 = arith.constant 0 : i32
    %c0_i32_1 = arith.constant 0 : i32
    return %arg0, %c0_i32, %c0_i32_0 : i32, i32, i32
  }
  func.func @transform_1(%arg0: i32) -> (i32, i32) {
    %c0_i32 = arith.constant 0 : i32
    %c0_i32_0 = arith.constant 0 : i32
    %c0_i32_1 = arith.constant 0 : i32
    return %c0_i32, %c0_i32_0 : i32, i32
  }
  func.func @transform_2(%arg0: i32) -> (i32, i32) {
    %c0_i32 = arith.constant 0 : i32
    %c0_i32_0 = arith.constant 0 : i32
    %c0_i32_1 = arith.constant 0 : i32
    return %c0_i32, %c0_i32_0 : i32, i32
  }
  func.func @transform_3(%arg0: i32) -> (i32, i32) {
    %c0_i32 = arith.constant 0 : i32
    %c0_i32_0 = arith.constant 0 : i32
    %c0_i32_1 = arith.constant 0 : i32
    return %c0_i32, %c0_i32_0 : i32, i32
  }
  func.func @transform_4(%arg0: i32) -> (i32, i32, i32) {
    %c0_i32 = arith.constant 0 : i32
    %c0_i32_0 = arith.constant 0 : i32
    %c0_i32_1 = arith.constant 0 : i32
    return %arg0, %c0_i32, %c0_i32_0 : i32, i32, i32
  }
  func.func @transform_5(%arg0: i32) -> (i32, i32, i32) {
    %c0_i32 = arith.constant 0 : i32
    %c0_i32_0 = arith.constant 0 : i32
    %c0_i32_1 = arith.constant 0 : i32
    return %arg0, %c0_i32, %c0_i32_0 : i32, i32, i32
  }
}

</mosaic_0001>

<llo_original>
// kernel: tpu_custom_call.1
$region0: #{tpu_custom_call.1}
  #allocation0 [shape = 'u32[]', space=smem, size = 0x4, offset = 0x4, fixed_abs, tag = 'smem constant byte address 0x4 - core index']
  #allocation1 [shape = 'u32[72,128]{1,0:T(1,128)}', space=vmem, size = 0x9000, scoped, tag = 'internal scratch']
  %s0 = inlined_call_operand.vmem [shape: f32[1,308,128], index: 0, kind: input, shape index: {}]
  %s1 = inlined_call_operand.vmem [shape: f32[28,308], index: 1, kind: input, shape index: {}]
  %s2 = inlined_call_operand.vmem [shape: f32[28,1], index: 2, kind: input, shape index: {}]
  %s3 = inlined_call_operand.vmem [shape: f32[28,1], index: 3, kind: input, shape index: {}]
  %s4 = inlined_call_operand.vmem [shape: f32[1,1,128], index: 4, kind: input, shape index: {}]
  %s5 = inlined_call_operand.vmem [shape: f32[1,28,128], index: 5, kind: output, shape index: {}]
  %s6 = sld [smem:[#allocation0]]
  $region30: #{tpu_custom_call.1} parent=0
    _
  %s8 = ssub.s32 1, %s6
  %s9 = scalar_select 0, %s8, %s6
  // Predicated region
  $region2: #{tpu_custom_call.1} parent=0 // pred_check
    _
  $region3: #{tpu_custom_call.1} parent=0 // pred_check_branch
    %11 = sbr.rel (0) target = $region5
  $region4: #{tpu_custom_call.1} parent=0 // pred_region
    _
  $region5: #{tpu_custom_call.1} parent=0 // pred_fallthru
    _
  // Predicated region
  $region6: #{tpu_custom_call.1} parent=0 // pred_check
    _
  $region7: #{tpu_custom_call.1} parent=0 // pred_check_branch
    %13 = sbr.rel (0) target = $region9
  $region8: #{tpu_custom_call.1} parent=0 // pred_region
    _
  $region9: #{tpu_custom_call.1} parent=0 // pred_fallthru
    _
  // Predicated region
  $region10: #{tpu_custom_call.1} parent=0 // pred_check
    _
  $region11: #{tpu_custom_call.1} parent=0 // pred_check_branch
    %15 = sbr.rel (0) target = $region13
  $region12: #{tpu_custom_call.1} parent=0 // pred_region
    _
  $region13: #{tpu_custom_call.1} parent=0 // pred_fallthru
    _
  // Predicated region
  $region14: #{tpu_custom_call.1} parent=0 // pred_check
    _
  $region15: #{tpu_custom_call.1} parent=0 // pred_check_branch
    %17 = sbr.rel (0) target = $region17
  $region16: #{tpu_custom_call.1} parent=0 // pred_region
    _
  $region17: #{tpu_custom_call.1} parent=0 // pred_fallthru
    _
  // Predicated region
  $region18: #{tpu_custom_call.1} parent=0 // pred_check
    _
  $region19: #{tpu_custom_call.1} parent=0 // pred_check_branch
    %19 = sbr.rel (0) target = $region21
  $region20: #{tpu_custom_call.1} parent=0 // pred_region
    _
  $region21: #{tpu_custom_call.1} parent=0 // pred_fallthru
    _
  %v20 = vld [vmem:[%s1] sm:$0xff]
  %v21 = vld [vmem:[%s1 + $0x8] sm:$0xff]
  %v22 = vld [vmem:[%s1 + $0x10] sm:$0xff]
  %v23 = vld [vmem:[%s1 + $0x18] sm:$0xff]
  %v24 = vld [vmem:[%s1 + $0x20] sm:$0xff]
  %v25 = vld [vmem:[%s1 + $0x28] sm:$0xff]
  %v26 = vld [vmem:[%s1 + $0x30] sm:$0xff]
  %v27 = vld [vmem:[%s1 + $0x38] sm:$0xff]
  %v28 = vld [vmem:[%s1 + $0x40] sm:$0xff]
  %v29 = vld [vmem:[%s1 + $0x48] sm:$0xf]
  %v30 = vld [vmem:[%s1 + $0x50] sm:$0xf]
  %v31 = vld [vmem:[%s1 + $0x58] sm:$0xf]
  %v32 = vld [vmem:[%s0] sm:$0xff]
  %v33 = vld [vmem:[%s0 + $0x8] sm:$0xff]
  %v34 = vld [vmem:[%s0 + $0x10] sm:$0xff]
  %v35 = vld [vmem:[%s0 + $0x18] sm:$0xff]
  %v36 = vld [vmem:[%s0 + $0x20] sm:$0xff]
  %v37 = vld [vmem:[%s0 + $0x28] sm:$0xff]
  %v38 = vld [vmem:[%s0 + $0x30] sm:$0xff]
  %v39 = vld [vmem:[%s0 + $0x38] sm:$0xff]
  %v40 = vld [vmem:[%s0 + $0x40] sm:$0xff]
  %v41 = vld [vmem:[%s0 + $0x48] sm:$0xff]
  %v42 = vld [vmem:[%s0 + $0x50] sm:$0xff]
  %v43 = vld [vmem:[%s0 + $0x58] sm:$0xff]
  %v44 = vld [vmem:[%s0 + $0x60] sm:$0xff]
  %v45 = vld [vmem:[%s0 + $0x68] sm:$0xff]
  %v46 = vld [vmem:[%s0 + $0x70] sm:$0xff]
  %v47 = vld [vmem:[%s0 + $0x78] sm:$0xff]
  %v48 = vld [vmem:[%s0 + $0x80] sm:$0xff]
  %v49 = vld [vmem:[%s0 + $0x88] sm:$0xff]
  %v50 = vld [vmem:[%s0 + $0x90] sm:$0xff]
  %v51 = vld [vmem:[%s0 + $0x98] sm:$0xff]
  %v52 = vld [vmem:[%s0 + $0xa0] sm:$0xff]
  %v53 = vld [vmem:[%s0 + $0xa8] sm:$0xff]
  %v54 = vld [vmem:[%s0 + $0xb0] sm:$0xff]
  %v55 = vld [vmem:[%s0 + $0xb8] sm:$0xff]
  %v56 = vld [vmem:[%s0 + $0xc0] sm:$0xff]
  %v57 = vld [vmem:[%s0 + $0xc8] sm:$0xff]
  %v58 = vld [vmem:[%s0 + $0xd0] sm:$0xff]
  %v59 = vld [vmem:[%s0 + $0xd8] sm:$0xff]
  %v60 = vld [vmem:[%s0 + $0xe0] sm:$0xff]
  %v61 = vld [vmem:[%s0 + $0xe8] sm:$0xff]
  %v62 = vld [vmem:[%s0 + $0xf0] sm:$0xff]
  %v63 = vld [vmem:[%s0 + $0xf8] sm:$0xff]
  %v64 = vld [vmem:[%s0 + $0x100] sm:$0xff]
  %v65 = vld [vmem:[%s0 + $0x108] sm:$0xff]
  %v66 = vld [vmem:[%s0 + $0x110] sm:$0xff]
  %v67 = vld [vmem:[%s0 + $0x118] sm:$0xff]
  %v68 = vld [vmem:[%s0 + $0x120] sm:$0xff]
  %v69 = vld [vmem:[%s0 + $0x128] sm:$0xff]
  %v70 = vld [vmem:[%s0 + $0x130] sm:$0xf]
  %vm71 = vcmask 424960
  %v73 = vsel %vm71, %v22, 0
  %v76 = vsel %vm71, %v25, 0
  %v79 = vsel %vm71, %v28, 0
  %v82 = vsel %vm71, %v31, 0
  %vm84 = vcmask 1043456
  %v86 = vsel %vm84, %v70, 0
  %88 = vmatpush.msra.mxu0 %v47
  %89 = vmatpush.msra.mxu0 %v46
  %90 = vmatpush.msra.mxu0 %v45
  %91 = vmatpush.msra.mxu0 %v44
  %92 = vmatpush.msra.mxu0 %v43
  %93 = vmatpush.msra.mxu0 %v42
  %94 = vmatpush.msra.mxu0 %v41
  %95 = vmatpush.msra.mxu0 %v40
  %96 = vmatpush.msra.mxu0 %v39
  %97 = vmatpush.msra.mxu0 %v38
  %98 = vmatpush.msra.mxu0 %v37
  %99 = vmatpush.msra.mxu0 %v36
  %100 = vmatpush.msra.mxu0 %v35
  %101 = vmatpush.msra.mxu0 %v34
  %102 = vmatpush.msra.mxu0 %v33
  %103 = vmatpush.msra.mxu0 %v32
  %104 = vmatmul.f32.gmra.mxu0 %v20
  %v105 = vpop.f32.mrf.mxu0
  %v106 = vadd.f32 0.0, %v105
  %107 = vmatmul.f32.gmra.mxu0 %v23
  %v108 = vpop.f32.mrf.mxu0
  %v109 = vadd.f32 0.0, %v108
  %110 = vmatmul.f32.gmra.mxu0 %v26
  %v111 = vpop.f32.mrf.mxu0
  %v112 = vadd.f32 0.0, %v111
  %113 = vmatmul.f32.gmra.mxu0 %v29
  %v114 = vpop.f32.mrf.mxu0
  %v115 = vadd.f32 0.0, %v114
  %116 = vdwg.mxu0
  %117 = vmatpush.msra.mxu0 %v63
  %118 = vmatpush.msra.mxu0 %v62
  %119 = vmatpush.msra.mxu0 %v61
  %120 = vmatpush.msra.mxu0 %v60
  %121 = vmatpush.msra.mxu0 %v59
  %122 = vmatpush.msra.mxu0 %v58
  %123 = vmatpush.msra.mxu0 %v57
  %124 = vmatpush.msra.mxu0 %v56
  %125 = vmatpush.msra.mxu0 %v55
  %126 = vmatpush.msra.mxu0 %v54
  %127 = vmatpush.msra.mxu0 %v53
  %128 = vmatpush.msra.mxu0 %v52
  %129 = vmatpush.msra.mxu0 %v51
  %130 = vmatpush.msra.mxu0 %v50
  %131 = vmatpush.msra.mxu0 %v49
  %132 = vmatpush.msra.mxu0 %v48
  %133 = vmatmul.f32.gmra.mxu0 %v21
  %v134 = vpop.f32.mrf.mxu0
  %v135 = vadd.f32 %v106, %v134
  %136 = vmatmul.f32.gmra.mxu0 %v24
  %v137 = vpop.f32.mrf.mxu0
  %v138 = vadd.f32 %v109, %v137
  %139 = vmatmul.f32.gmra.mxu0 %v27
  %v140 = vpop.f32.mrf.mxu0
  %v141 = vadd.f32 %v112, %v140
  %142 = vmatmul.f32.gmra.mxu0 %v30
  %v143 = vpop.f32.mrf.mxu0
  %v144 = vadd.f32 %v115, %v143
  %145 = vdwg.mxu0
  %146 = vmatpush.msra.mxu0 0.0
  %147 = vmatpush.msra.mxu0 0.0
  %148 = vmatpush.msra.mxu0 0.0
  %149 = vmatpush.msra.mxu0 0.0
  %150 = vmatpush.msra.mxu0 0.0
  %151 = vmatpush.msra.mxu0 0.0
  %152 = vmatpush.msra.mxu0 0.0
  %153 = vmatpush.msra.mxu0 0.0
  %154 = vmatpush.msra.mxu0 0.0
  %155 = vmatpush.msra.mxu0 %v86
  %156 = vmatpush.msra.mxu0 %v69
  %157 = vmatpush.msra.mxu0 %v68
  %158 = vmatpush.msra.mxu0 %v67
  %159 = vmatpush.msra.mxu0 %v66
  %160 = vmatpush.msra.mxu0 %v65
  %161 = vmatpush.msra.mxu0 %v64
  %162 = vmatmul.f32.gmra.mxu0 %v73
  %v163 = vpop.f32.mrf.mxu0
  %v164 = vadd.f32 %v135, %v163
  %165 = vmatmul.f32.gmra.mxu0 %v76
  %v166 = vpop.f32.mrf.mxu0
  %v167 = vadd.f32 %v138, %v166
  %168 = vmatmul.f32.gmra.mxu0 %v79
  %v169 = vpop.f32.mrf.mxu0
  %v170 = vadd.f32 %v141, %v169
  %171 = vmatmul.f32.gmra.mxu0 %v82
  %v172 = vpop.f32.mrf.mxu0
  %v173 = vadd.f32 %v144, %v172
  %174 = vdwg.mxu0
  %v175 = vld [vmem:[%s2] sm:$0xff]
  %v176 = vld [vmem:[%s2 + $0x8] sm:$0xff]
  %v177 = vld [vmem:[%s2 + $0x10] sm:$0xff]
  %v178 = vld [vmem:[%s2 + $0x18] sm:$0xf]
  %180 = vset.pattern.permute.xlu0 0
  %181 = vperm.xlu0 %180, %v175
  %v182 = vpop.permute.xlu0 %181
  %185 = vset.pattern.permute.xlu0 0
  %186 = vperm.xlu0 %185, %v176
  %v187 = vpop.permute.xlu0 %186
  %190 = vset.pattern.permute.xlu0 0
  %191 = vperm.xlu0 %190, %v177
  %v192 = vpop.permute.xlu0 %191
  %195 = vset.pattern.permute.xlu0 0
  %196 = vperm.xlu0 %195, %v178
  %v197 = vpop.permute.xlu0 %196
  %v199 = vmul.f32 %v164, %v182
  %v200 = vmul.f32 %v167, %v187
  %v201 = vmul.f32 %v170, %v192
  %v202 = vmul.f32 %v173, %v197
  %v203 = vld [vmem:[%s3] sm:$0xff]
  %v204 = vld [vmem:[%s3 + $0x8] sm:$0xff]
  %v205 = vld [vmem:[%s3 + $0x10] sm:$0xff]
  %v206 = vld [vmem:[%s3 + $0x18] sm:$0xf]
  %208 = vset.pattern.permute.xlu0 0
  %209 = vperm.xlu0 %208, %v203
  %v210 = vpop.permute.xlu0 %209
  %213 = vset.pattern.permute.xlu0 0
  %214 = vperm.xlu0 %213, %v204
  %v215 = vpop.permute.xlu0 %214
  %218 = vset.pattern.permute.xlu0 0
  %219 = vperm.xlu0 %218, %v205
  %v220 = vpop.permute.xlu0 %219
  %223 = vset.pattern.permute.xlu0 0
  %224 = vperm.xlu0 %223, %v206
  %v225 = vpop.permute.xlu0 %224
  %v227 = vadd.f32 %v199, %v210
  %v228 = vadd.f32 %v200, %v215
  %v229 = vadd.f32 %v201, %v220
  %v230 = vadd.f32 %v202, %v225
  %vm231 = vcmp.ge.f32.partialorder %v227, 0.0
  %vm232 = vcmp.ge.f32.partialorder %v228, 0.0
  %vm233 = vcmp.ge.f32.partialorder %v229, 0.0
  %vm234 = vcmp.ge.f32.partialorder %v230, 0.0
  %v235 = vmul.f32 %v227, 0.01
  %v236 = vmul.f32 %v228, 0.01
  %v237 = vmul.f32 %v229, 0.01
  %v238 = vmul.f32 %v230, 0.01
  %v239 = vsel %vm231, %v227, %v235
  %v240 = vsel %vm232, %v228, %v236
  %v241 = vsel %vm233, %v229, %v237
  %v242 = vsel %vm234, %v230, %v238
  %v243 = vld [vmem:[%s4] sm:$0x1]
  %v245 = vperm.slane %v243, 0
  %v247 = vmul.f32 %v239, %v245
  %v248 = vmul.f32 %v240, %v245
  %v249 = vmul.f32 %v241, %v245
  %v250 = vmul.f32 %v242, %v245
  %251 = vst [vmem:[%s5] sm:$0xff] %v247
  %252 = vst [vmem:[%s5 + $0x8] sm:$0xff] %v248
  %253 = vst [vmem:[%s5 + $0x10] sm:$0xff] %v249
  %254 = vst [vmem:[%s5 + $0x18] sm:$0xf] %v250
  // Predicated region
  $region22: #{tpu_custom_call.1} parent=0 // pred_check
    _
  $region23: #{tpu_custom_call.1} parent=0 // pred_check_branch
    %256 = sbr.rel (0) target = $region25
  $region24: #{tpu_custom_call.1} parent=0 // pred_region
    _
  $region25: #{tpu_custom_call.1} parent=0 // pred_fallthru
    _
  // Predicated region
  $region26: #{tpu_custom_call.1} parent=0 // pred_check
    _
  $region27: #{tpu_custom_call.1} parent=0 // pred_check_branch
    %258 = sbr.rel (0) target = $region29
  $region28: #{tpu_custom_call.1} parent=0 // pred_region
    _
  $region29: #{tpu_custom_call.1} parent=0 // pred_fallthru
    _

</llo_original>
